<compile_context>
chip_gen: v7x
topology: tpu7x:2x2x1
jax: 0.10.0
libtpu: 0.0.40
codegen_flags: <defaults>
</compile_context>

<pallas_src>
import functools

import jax
import jax.numpy as jnp
from jax import lax
from jax.experimental import pallas as pl
from jax.experimental.pallas import tpu as pltpu


def _round_up(x, m):
    return (x + m - 1) // m * m


def _pick_block_b(B, T, target_rows=512):
    """Largest divisor BB of B with BB*T <= target_rows (fat MXU M, short grid).
    Prefers leaving >=2 grid steps (v7x has two TensorCores) when that doesn't
    drop the matmul M dimension below ~128."""
    divs = [d for d in range(1, B + 1) if B % d == 0]
    ok = [d for d in divs if d * T <= max(target_rows, T)]
    bb = max(ok) if ok else 1
    two = [d for d in ok if B // d >= 2 and d * T >= 128]
    if B // bb < 2 and two:
        bb = max(two)
    return bb


def mha_kernel(x_ref, wqkv_ref, bqkv_ref, wm_ref, bm_ref, qmask_ref, bmask_ref,
               wfcs_ref, selmask_ref, fold_ref, rowsum_ref, colsum_ref, bfc_ref,
               out_ref, attn_ref, *, hkp, scale, inv_t):
    """One block of BB batch elements per grid step; all contractions on the MXU."""
    mmdt = x_ref.dtype            # matmul-input dtype (f32 or bf16); acc stays f32
    f32 = jnp.float32

    x = x_ref[...]                                                    # [BB*T, D]

    # Fused, lane-padded [q | k | v] projection: one fat-M MXU matmul.
    qkv = jnp.dot(x, wqkv_ref[...],
                  preferred_element_type=f32) + bqkv_ref[...]         # [BB*T, 2*HKp+Dp]
    q2 = qkv[:, :hkp]                       # [BB*T, HKp]  (128-lane aligned slices)
    k2 = qkv[:, hkp:2 * hkp]                # [BB*T, HKp]
    v2 = qkv[:, 2 * hkp:]                   # [BB*T, Dp]   (zero in pad lanes)

    bmask = bmask_ref[...]                                            # [BB*H, BB*T] 0/1

    # Per-batch mean of q over time, replicated to every head row, via one matmul
    # with the 0/1 same-batch mask (bmask/T plays the role of a mean matrix).
    q_rep = jnp.dot(bmask.astype(mmdt), q2.astype(mmdt),
                    preferred_element_type=f32) * inv_t               # [BB*H, HKp]
    # w_master applied to every head at once via the block-diagonal weight.
    q_master = jnp.dot(q_rep.astype(mmdt), wm_ref[...],
                       preferred_element_type=f32) + bm_ref[...]      # [BB*H, HKp]
    # Keep only each row's own head block so one q @ k^T covers all heads/batches.
    q_scat = q_master * qmask_ref[...]                                # [BB*H, HKp]

    scores = lax.dot_general(q_scat.astype(mmdt), k2.astype(mmdt),
                             dimension_numbers=(((1,), (1,)), ((), ())),
                             preferred_element_type=f32) * scale      # [BB*H, BB*T]
    # Mask cross-batch entries, then softmax over time (all in f32).
    scores = jnp.where(bmask > 0, scores, -jnp.inf)
    m = jnp.max(scores, axis=-1, keepdims=True)
    e = jnp.exp(scores - m)
    attn = e / jnp.sum(e, axis=-1, keepdims=True)                     # [BB*H, BB*T]
    # (off-batch entries are exactly 0 after the masked softmax)

    # attn output written as a dense [T, BB*H] slab:
    #   attn_t[t, b*H+h] = attn[b*H+h, b*T+t]   (column fold over the zero blocks)
    attn_t = lax.dot_general(colsum_ref[...], attn,
                             dimension_numbers=(((0,), (1,)), ((), ())),
                             preferred_element_type=f32)              # [T, BB*H]
    attn_ref[...] = attn_t.astype(attn_ref.dtype)

    # fc folded onto the value path: wfcs[d, h*O+o] = Wfc[o, d*H+h], so both the
    # per-head weighted sums and the output projection are plain MXU matmuls.
    vproj = jnp.dot(v2.astype(mmdt), wfcs_ref[...],
                    preferred_element_type=f32)                       # [BB*T, H*O]
    r = jnp.dot(attn.astype(mmdt), vproj.astype(mmdt),
                preferred_element_type=f32)                           # [BB*H, H*O]
    r_sel = r * selmask_ref[...]            # keep each head-row's own column block
    folded = jnp.dot(r_sel, fold_ref[...],
                     preferred_element_type=f32)                      # [BB*H, O]
    out = jnp.dot(rowsum_ref[...], folded,
                  preferred_element_type=f32) + bfc_ref[...]          # [BB, O]
    out_ref[...] = out.astype(out_ref.dtype)


def _prepare_params(torch_params, n_head, d_k, compute_dtype):
    """One-time weight repacking (hoisted out of the per-forward path)."""
    Wk, bk, Wq, bq, Wv, bv, Wm, bm, Wfc, bfc = [
        jnp.asarray(p, jnp.float32) for p in torch_params]
    d_model = Wv.shape[0]
    assert d_k == d_model, "module's fc is only shape-consistent when d_k == d_model"
    H, O = n_head, d_model
    HK = H * d_k
    HKp = _round_up(HK, 128)         # lane-aligned widths for the fused projection
    Dp = _round_up(d_model, 128)
    f32 = jnp.float32

    def padc(a, w):                  # zero-pad columns (last dim) to width w
        return jnp.pad(a, ((0, 0), (0, w - a.shape[1])))

    wqkv = jnp.concatenate([padc(Wq.T, HKp), padc(Wk.T, HKp), padc(Wv.T, Dp)],
                           axis=1)                                    # [D, 2HKp+Dp]
    bqkv = jnp.concatenate([jnp.pad(bq, (0, HKp - HK)),
                            jnp.pad(bk, (0, HKp - HK)),
                            jnp.pad(bv, (0, Dp - d_model))]).reshape(1, -1)
    wm_bd = jnp.pad(jnp.kron(jnp.eye(H, dtype=f32), Wm.T),
                    ((0, HKp - HK), (0, HKp - HK)))                   # [HKp, HKp]
    bm_t = jnp.pad(jnp.tile(bm, H), (0, HKp - HK)).reshape(1, HKp)
    # fc moved onto the value path: wfcs[d, h*O + o] = Wfc[o, d*H + h]
    wfcs = Wfc.reshape(O, d_model, H).transpose(1, 2, 0).reshape(d_model, H * O)
    wfcs = jnp.pad(wfcs, ((0, Dp - d_model), (0, 0)))                 # [Dp, H*O]
    fold = jnp.kron(jnp.ones((H, 1), f32), jnp.eye(O, dtype=f32))     # [H*O, O]
    bfc_r = bfc.reshape(1, O)

    return dict(
        wqkv=wqkv.astype(compute_dtype), bqkv=bqkv,
        wm=wm_bd.astype(compute_dtype), bm=bm_t,
        wfcs=wfcs.astype(compute_dtype), fold=fold, bfc=bfc_r,
        n_head=H, d_k=d_k, d_model=O, hkp=HKp,
        compute_dtype=compute_dtype,
    )


def _mha_forward(x, packed, block_b=None):
    B, T, D = x.shape
    H, O, HKp, d_k = packed["n_head"], packed["d_model"], packed["hkp"], packed["d_k"]
    assert D == O
    cdt = packed["compute_dtype"]
    f32 = jnp.float32

    BB = block_b or _pick_block_b(B, T)
    assert B % BB == 0
    G = B // BB

    # Cheap shape-only 0/1 selection constants (constant-folded under jit).
    bmask = jnp.kron(jnp.eye(BB, dtype=f32), jnp.ones((H, T), f32))       # [BB*H, BB*T]
    qmask = jnp.pad(jnp.kron(jnp.eye(H, dtype=f32), jnp.ones((1, d_k), f32)),
                    ((0, 0), (0, HKp - H * d_k)))                          # [H, HKp]
    qmask_bb = jnp.tile(qmask, (BB, 1))                                    # [BB*H, HKp]
    selmask_bb = jnp.tile(jnp.kron(jnp.eye(H, dtype=f32), jnp.ones((1, O), f32)),
                          (BB, 1))                                         # [BB*H, H*O]
    rowsum = jnp.kron(jnp.eye(BB, dtype=f32), jnp.ones((1, H), f32))       # [BB, BB*H]
    colsum = jnp.tile(jnp.eye(T, dtype=f32), (BB, 1))                      # [BB*T, T]

    # Flatten batch blocks so the kernel sees a [BB*T, D] slab (free reshape).
    x3 = x.astype(cdt).reshape(G, BB * T, D)

    kernel = functools.partial(mha_kernel, hkp=HKp,
                               scale=float(d_k) ** -0.5, inv_t=1.0 / T)

    def resident(a):   # full array resident in VMEM, reused by every grid step
        return pl.BlockSpec(a.shape, lambda i: (0,) * a.ndim)

    out3, attn3 = pl.pallas_call(
        kernel,
        grid=(G,),
        in_specs=[
            pl.BlockSpec((None, BB * T, D), lambda i: (i, 0, 0)),          # x block
            resident(packed["wqkv"]), resident(packed["bqkv"]),
            resident(packed["wm"]), resident(packed["bm"]),
            resident(qmask_bb), resident(bmask),
            resident(packed["wfcs"]), resident(selmask_bb),
            resident(packed["fold"]), resident(rowsum), resident(colsum),
            resident(packed["bfc"]),
        ],
        out_specs=(
            pl.BlockSpec((None, BB, O), lambda i: (i, 0, 0)),              # [BB, O]
            pl.BlockSpec((None, T, BB * H), lambda i: (i, 0, 0)),          # [T, BB*H]
        ),
        out_shape=(jax.ShapeDtypeStruct((G, BB, O), f32),
                   jax.ShapeDtypeStruct((G, T, BB * H), f32)),
        compiler_params=pltpu.CompilerParams(
            dimension_semantics=("parallel",),        # shards steps across v7x's 2 TCs
            vmem_limit_bytes=48 * 1024 * 1024),        # safe on v7x's 64 MiB VMEM
    )(x3, packed["wqkv"], packed["bqkv"], packed["wm"], packed["bm"],
      qmask_bb, bmask, packed["wfcs"], selmask_bb,
      packed["fold"], rowsum, colsum, packed["bfc"])

    out = out3.reshape(B, O)
    attn = attn3.transpose(0, 2, 1).reshape(B, H, T)
    return out, attn


def make_mha(torch_params, n_head, d_k, compute_dtype=jnp.bfloat16):
    """Pack the PyTorch weights once; returns a forward(x) closure (jit-friendly)."""
    packed = _prepare_params(torch_params, n_head, d_k, compute_dtype)

    def forward(x, block_b=None):
        return _mha_forward(x, packed, block_b)

    return forward


def reference(x, torch_params, n_head, d_k):
    """Pure-JAX mirror of the PyTorch forward, for validation."""
    Wk, bk, Wq, bq, Wv, bv, Wm, bm, Wfc, bfc = torch_params
    B, T, D = x.shape
    scale = d_k ** (-0.5)
    k = (x @ Wk.T + bk).reshape(B, T, n_head, d_k).transpose(0, 2, 1, 3)   # [B,H,T,dk]
    q = (x @ Wq.T + bq).reshape(B, T, n_head, d_k).transpose(0, 2, 1, 3)   # [B,H,T,dk]
    v = jnp.repeat((x @ Wv.T + bv)[:, None, :, :], n_head, axis=1)         # [B,H,T,D]
    q_mean = q.mean(axis=2)                                                # [B,H,dk]
    q_master = (q_mean @ Wm.T + bm)[:, :, None, :]                         # [B,H,1,dk]
    attn = jnp.matmul(q_master, jnp.swapaxes(k, 2, 3)) * scale             # [B,H,1,T]
    attn = jax.nn.softmax(attn, axis=-1)
    output = jnp.matmul(attn, v)                                           # [B,H,1,D]
    output = output[:, :, 0, :].transpose(0, 2, 1).reshape(B, n_head * D)  # [B, H*D]
    output = output @ Wfc.T + bfc
    return output, attn[:, :, 0, :]


if __name__ == "__main__":
    B, T = 2, 8
    d_model = 32
    n_head = 4
    d_k = 32  # must equal d_model for the module's fc to be shape-consistent

    key = jax.random.PRNGKey(0)
    ks = jax.random.split(key, 11)

    def init_linear(kw, kb, out_f, in_f):
        bound = 1.0 / (in_f ** 0.5)
        W = jax.random.uniform(kw, (out_f, in_f), jnp.float32, -bound, bound)
        b = jax.random.uniform(kb, (out_f,), jnp.float32, -bound, bound)
        return W, b

    Wk, bk = init_linear(ks[0], ks[1], n_head * d_k, d_model)
    Wq, bq = init_linear(ks[2], ks[3], n_head * d_k, d_model)
    Wv, bv = init_linear(ks[4], ks[5], d_model, d_model)
    Wm, bm = init_linear(ks[6], ks[7], d_k, d_k)
    Wfc, bfc = init_linear(ks[8], ks[9], d_model, n_head * d_k)
    params = (Wk, bk, Wq, bq, Wv, bv, Wm, bm, Wfc, bfc)

    x = jax.random.normal(ks[10], (B, T, d_model), jnp.float32)

    ref_out, ref_attn = reference(x, params, n_head, d_k)

    # float32 matmul-input path (near-exact vs reference)
    fwd_f32 = jax.jit(make_mha(params, n_head, d_k, compute_dtype=jnp.float32))
    out, attn = fwd_f32(x)
    jax.block_until_ready((out, attn))
    assert out.shape == (B, d_model) and attn.shape == (B, n_head, T)
    assert jnp.allclose(out, ref_out, atol=5e-4, rtol=5e-4), "output mismatch (f32)"
    assert jnp.allclose(attn, ref_attn, atol=1e-4, rtol=1e-4), "attn mismatch (f32)"

    # bf16 matmul-input path (fast MXU path on v5e/v6e/v7x); f32 accumulate/softmax.
    fwd_bf16 = jax.jit(make_mha(params, n_head, d_k, compute_dtype=jnp.bfloat16))
    out_bf, attn_bf = fwd_bf16(x)
    jax.block_until_ready((out_bf, attn_bf))
    assert jnp.allclose(out_bf, ref_out, atol=5e-2, rtol=5e-2), "output mismatch (bf16)"
    assert jnp.allclose(attn_bf, ref_attn, atol=3e-2, rtol=3e-2), "attn mismatch (bf16)"

    print("KERNEL_OK")
</pallas_src>

<mosaic_0001>
module attributes {stable_mosaic.version = 11 : i64} {
  func.func @mha_kernel(%arg0: i32, %arg1: memref<1x16x32xf32, #tpu.memory_space<vmem>>, %arg2: memref<32x384xf32, #tpu.memory_space<vmem>>, %arg3: memref<1x384xf32, #tpu.memory_space<vmem>>, %arg4: memref<128x128xf32, #tpu.memory_space<vmem>>, %arg5: memref<1x128xf32, #tpu.memory_space<vmem>>, %arg6: memref<8x128xf32, #tpu.memory_space<vmem>>, %arg7: memref<8x16xf32, #tpu.memory_space<vmem>>, %arg8: memref<128x128xf32, #tpu.memory_space<vmem>>, %arg9: memref<8x128xf32, #tpu.memory_space<vmem>>, %arg10: memref<128x32xf32, #tpu.memory_space<vmem>>, %arg11: memref<2x8xf32, #tpu.memory_space<vmem>>, %arg12: memref<16x8xf32, #tpu.memory_space<vmem>>, %arg13: memref<1x32xf32, #tpu.memory_space<vmem>>, %arg14: memref<1x2x32xf32, #tpu.memory_space<vmem>>, %arg15: memref<1x8x8xf32, #tpu.memory_space<vmem>>) attributes {dimension_semantics = [#tpu.dimension_semantics<parallel>], iteration_bounds = array<i64: 1>, scalar_prefetch = 0 : i64, scratch_operands = 0 : i64, tpu.core_type = #tpu.core_type<tc>, window_params = [{transform_indices = @transform_0, window_bounds = array<i64: 1, 16, 32>}, {pipeline_mode = #tpu.pipeline_mode<synchronous>, transform_indices = @transform_1, window_bounds = array<i64: 32, 384>}, {pipeline_mode = #tpu.pipeline_mode<synchronous>, transform_indices = @transform_2, window_bounds = array<i64: 1, 384>}, {pipeline_mode = #tpu.pipeline_mode<synchronous>, transform_indices = @transform_3, window_bounds = array<i64: 128, 128>}, {pipeline_mode = #tpu.pipeline_mode<synchronous>, transform_indices = @transform_4, window_bounds = array<i64: 1, 128>}, {pipeline_mode = #tpu.pipeline_mode<synchronous>, transform_indices = @transform_5, window_bounds = array<i64: 8, 128>}, {pipeline_mode = #tpu.pipeline_mode<synchronous>, transform_indices = @transform_6, window_bounds = array<i64: 8, 16>}, {pipeline_mode = #tpu.pipeline_mode<synchronous>, transform_indices = @transform_7, window_bounds = array<i64: 128, 128>}, {pipeline_mode = #tpu.pipeline_mode<synchronous>, transform_indices = @transform_8, window_bounds = array<i64: 8, 128>}, {pipeline_mode = #tpu.pipeline_mode<synchronous>, transform_indices = @transform_9, window_bounds = array<i64: 128, 32>}, {pipeline_mode = #tpu.pipeline_mode<synchronous>, transform_indices = @transform_10, window_bounds = array<i64: 2, 8>}, {pipeline_mode = #tpu.pipeline_mode<synchronous>, transform_indices = @transform_11, window_bounds = array<i64: 16, 8>}, {pipeline_mode = #tpu.pipeline_mode<synchronous>, transform_indices = @transform_12, window_bounds = array<i64: 1, 32>}, {transform_indices = @transform_13, window_bounds = array<i64: 1, 2, 32>}, {transform_indices = @transform_14, window_bounds = array<i64: 1, 8, 8>}]} {
    %c0 = arith.constant 0 : index
    %c0_0 = arith.constant 0 : index
    %c0_1 = arith.constant 0 : index
    %0 = vector.load %arg1[%c0, %c0_0, %c0_1] : memref<1x16x32xf32, #tpu.memory_space<vmem>>, vector<1x16x32xf32>
    %1 = vector.shape_cast %0 : vector<1x16x32xf32> to vector<16x32xf32>
    %c0_2 = arith.constant 0 : index
    %c0_3 = arith.constant 0 : index
    %2 = vector.load %arg2[%c0_2, %c0_3] : memref<32x384xf32, #tpu.memory_space<vmem>>, vector<32x384xf32>
    %cst = arith.constant dense<0.000000e+00> : vector<16x384xf32>
    %3 = tpu.matmul %1, %2, %cst {dimension_numbers = #tpu.dot_dimension_numbers<[1], [0], [0], [1], [0, 0, 1, 1], [], []>} : vector<16x32xf32>, vector<32x384xf32>, vector<16x384xf32> -> vector<16x384xf32>
    %c0_4 = arith.constant 0 : index
    %c0_5 = arith.constant 0 : index
    %4 = vector.load %arg3[%c0_4, %c0_5] : memref<1x384xf32, #tpu.memory_space<vmem>>, vector<1x384xf32>
    %5 = vector.broadcast %4 : vector<1x384xf32> to vector<16x384xf32>
    %6 = arith.addf %3, %5 : vector<16x384xf32>
    %7 = vector.extract_strided_slice %6 {offsets = [0, 0], sizes = [16, 128], strides = [1, 1]} : vector<16x384xf32> to vector<16x128xf32>
    %8 = vector.extract_strided_slice %6 {offsets = [0, 128], sizes = [16, 128], strides = [1, 1]} : vector<16x384xf32> to vector<16x128xf32>
    %9 = vector.extract_strided_slice %6 {offsets = [0, 256], sizes = [16, 128], strides = [1, 1]} : vector<16x384xf32> to vector<16x128xf32>
    %c0_6 = arith.constant 0 : index
    %c0_7 = arith.constant 0 : index
    %10 = vector.load %arg7[%c0_6, %c0_7] : memref<8x16xf32, #tpu.memory_space<vmem>>, vector<8x16xf32>
    %cst_8 = arith.constant dense<0.000000e+00> : vector<8x128xf32>
    %11 = tpu.matmul %10, %7, %cst_8 {dimension_numbers = #tpu.dot_dimension_numbers<[1], [0], [0], [1], [0, 0, 1, 1], [], []>} : vector<8x16xf32>, vector<16x128xf32>, vector<8x128xf32> -> vector<8x128xf32>
    %cst_9 = arith.constant 1.250000e-01 : f32
    %12 = vector.broadcast %cst_9 : f32 to vector<8x128xf32>
    %13 = arith.mulf %11, %12 : vector<8x128xf32>
    %c0_10 = arith.constant 0 : index
    %c0_11 = arith.constant 0 : index
    %14 = vector.load %arg4[%c0_10, %c0_11] : memref<128x128xf32, #tpu.memory_space<vmem>>, vector<128x128xf32>
    %cst_12 = arith.constant dense<0.000000e+00> : vector<8x128xf32>
    %15 = tpu.matmul %13, %14, %cst_12 {dimension_numbers = #tpu.dot_dimension_numbers<[1], [0], [0], [1], [0, 0, 1, 1], [], []>} : vector<8x128xf32>, vector<128x128xf32>, vector<8x128xf32> -> vector<8x128xf32>
    %c0_13 = arith.constant 0 : index
    %c0_14 = arith.constant 0 : index
    %16 = vector.load %arg5[%c0_13, %c0_14] : memref<1x128xf32, #tpu.memory_space<vmem>>, vector<1x128xf32>
    %17 = vector.broadcast %16 : vector<1x128xf32> to vector<8x128xf32>
    %18 = arith.addf %15, %17 : vector<8x128xf32>
    %c0_15 = arith.constant 0 : index
    %c0_16 = arith.constant 0 : index
    %19 = vector.load %arg6[%c0_15, %c0_16] : memref<8x128xf32, #tpu.memory_space<vmem>>, vector<8x128xf32>
    %20 = arith.mulf %18, %19 : vector<8x128xf32>
    %cst_17 = arith.constant dense<0.000000e+00> : vector<8x16xf32>
    %21 = tpu.matmul %20, %8, %cst_17 {dimension_numbers = #tpu.dot_dimension_numbers<[1], [1], [0], [0], [0, 0, 1, 0], [], []>} : vector<8x128xf32>, vector<16x128xf32>, vector<8x16xf32> -> vector<8x16xf32>
    %cst_18 = arith.constant 0.176776692 : f32
    %22 = vector.broadcast %cst_18 : f32 to vector<8x16xf32>
    %23 = arith.mulf %21, %22 : vector<8x16xf32>
    %cst_19 = arith.constant 0.000000e+00 : f32
    %24 = vector.broadcast %cst_19 : f32 to vector<8x16xf32>
    %25 = arith.cmpf ogt, %10, %24 : vector<8x16xf32>
    %cst_20 = arith.constant 0xFF800000 : f32
    %26 = vector.broadcast %cst_20 : f32 to vector<8x16xf32>
    %27 = arith.select %25, %23, %26 : vector<8x16xi1>, vector<8x16xf32>
    %cst_21 = arith.constant dense<0xFF800000> : vector<8xf32>
    %28 = vector.multi_reduction <maximumf>, %27, %cst_21 [1] : vector<8x16xf32> to vector<8xf32>
    %29 = vector.shape_cast %28 : vector<8xf32> to vector<8x1xf32>
    %30 = vector.broadcast %29 : vector<8x1xf32> to vector<8x16xf32>
    %31 = arith.subf %27, %30 : vector<8x16xf32>
    %32 = math.exp %31 : vector<8x16xf32>
    %cst_22 = arith.constant dense<0.000000e+00> : vector<8xf32>
    %33 = vector.multi_reduction <add>, %32, %cst_22 [1] : vector<8x16xf32> to vector<8xf32>
    %34 = vector.shape_cast %33 : vector<8xf32> to vector<8x1xf32>
    %35 = vector.broadcast %34 : vector<8x1xf32> to vector<8x16xf32>
    %36 = arith.divf %32, %35 : vector<8x16xf32>
    %c0_23 = arith.constant 0 : index
    %c0_24 = arith.constant 0 : index
    %37 = vector.load %arg12[%c0_23, %c0_24] : memref<16x8xf32, #tpu.memory_space<vmem>>, vector<16x8xf32>
    %cst_25 = arith.constant dense<0.000000e+00> : vector<8x8xf32>
    %38 = tpu.matmul %37, %36, %cst_25 {dimension_numbers = #tpu.dot_dimension_numbers<[0], [1], [1], [0], [0, 1, 1, 0], [], []>} : vector<16x8xf32>, vector<8x16xf32>, vector<8x8xf32> -> vector<8x8xf32>
    %c0_26 = arith.constant 0 : index
    %c0_27 = arith.constant 0 : index
    %c0_28 = arith.constant 0 : index
    %39 = vector.load %arg15[%c0_26, %c0_27, %c0_28] : memref<1x8x8xf32, #tpu.memory_space<vmem>>, vector<1x8x8xf32>
    %40 = vector.shape_cast %39 : vector<1x8x8xf32> to vector<8x8xf32>
    %41 = vector.shape_cast %38 : vector<8x8xf32> to vector<1x8x8xf32>
    tpu.vector_store %arg15[%c0_26, %c0_27, %c0_28], %41 {strides = array<i32>} : memref<1x8x8xf32, #tpu.memory_space<vmem>>, vector<1x8x8xf32>,
    %c0_29 = arith.constant 0 : index
    %c0_30 = arith.constant 0 : index
    %42 = vector.load %arg8[%c0_29, %c0_30] : memref<128x128xf32, #tpu.memory_space<vmem>>, vector<128x128xf32>
    %cst_31 = arith.constant dense<0.000000e+00> : vector<16x128xf32>
    %43 = tpu.matmul %9, %42, %cst_31 {dimension_numbers = #tpu.dot_dimension_numbers<[1], [0], [0], [1], [0, 0, 1, 1], [], []>} : vector<16x128xf32>, vector<128x128xf32>, vector<16x128xf32> -> vector<16x128xf32>
    %cst_32 = arith.constant dense<0.000000e+00> : vector<8x128xf32>
    %44 = tpu.matmul %36, %43, %cst_32 {dimension_numbers = #tpu.dot_dimension_numbers<[1], [0], [0], [1], [0, 0, 1, 1], [], []>} : vector<8x16xf32>, vector<16x128xf32>, vector<8x128xf32> -> vector<8x128xf32>
    %c0_33 = arith.constant 0 : index
    %c0_34 = arith.constant 0 : index
    %45 = vector.load %arg9[%c0_33, %c0_34] : memref<8x128xf32, #tpu.memory_space<vmem>>, vector<8x128xf32>
    %46 = arith.mulf %44, %45 : vector<8x128xf32>
    %c0_35 = arith.constant 0 : index
    %c0_36 = arith.constant 0 : index
    %47 = vector.load %arg10[%c0_35, %c0_36] : memref<128x32xf32, #tpu.memory_space<vmem>>, vector<128x32xf32>
    %cst_37 = arith.constant dense<0.000000e+00> : vector<8x32xf32>
    %48 = tpu.matmul %46, %47, %cst_37 {dimension_numbers = #tpu.dot_dimension_numbers<[1], [0], [0], [1], [0, 0, 1, 1], [], []>} : vector<8x128xf32>, vector<128x32xf32>, vector<8x32xf32> -> vector<8x32xf32>
    %c0_38 = arith.constant 0 : index
    %c0_39 = arith.constant 0 : index
    %49 = vector.load %arg11[%c0_38, %c0_39] : memref<2x8xf32, #tpu.memory_space<vmem>>, vector<2x8xf32>
    %cst_40 = arith.constant dense<0.000000e+00> : vector<2x32xf32>
    %50 = tpu.matmul %49, %48, %cst_40 {dimension_numbers = #tpu.dot_dimension_numbers<[1], [0], [0], [1], [0, 0, 1, 1], [], []>} : vector<2x8xf32>, vector<8x32xf32>, vector<2x32xf32> -> vector<2x32xf32>
    %c0_41 = arith.constant 0 : index
    %c0_42 = arith.constant 0 : index
    %51 = vector.load %arg13[%c0_41, %c0_42] : memref<1x32xf32, #tpu.memory_space<vmem>>, vector<1x32xf32>
    %52 = vector.broadcast %51 : vector<1x32xf32> to vector<2x32xf32>
    %53 = arith.addf %50, %52 : vector<2x32xf32>
    %c0_43 = arith.constant 0 : index
    %c0_44 = arith.constant 0 : index
    %c0_45 = arith.constant 0 : index
    %54 = vector.load %arg14[%c0_43, %c0_44, %c0_45] : memref<1x2x32xf32, #tpu.memory_space<vmem>>, vector<1x2x32xf32>
    %55 = vector.shape_cast %54 : vector<1x2x32xf32> to vector<2x32xf32>
    %56 = vector.shape_cast %53 : vector<2x32xf32> to vector<1x2x32xf32>
    tpu.vector_store %arg14[%c0_43, %c0_44, %c0_45], %56 {strides = array<i32>} : memref<1x2x32xf32, #tpu.memory_space<vmem>>, vector<1x2x32xf32>,
    return
  }
  func.func @transform_0(%arg0: i32) -> (i32, i32, i32) {
    %c0_i32 = arith.constant 0 : i32
    %c0_i32_0 = arith.constant 0 : i32
    %c0_i32_1 = arith.constant 0 : i32
    return %arg0, %c0_i32, %c0_i32_0 : i32, i32, i32
  }
  func.func @transform_1(%arg0: i32) -> (i32, i32) {
    %c0_i32 = arith.constant 0 : i32
    %c0_i32_0 = arith.constant 0 : i32
    %c0_i32_1 = arith.constant 0 : i32
    return %c0_i32, %c0_i32_0 : i32, i32
  }
  func.func @transform_2(%arg0: i32) -> (i32, i32) {
    %c0_i32 = arith.constant 0 : i32
    %c0_i32_0 = arith.constant 0 : i32
    %c0_i32_1 = arith.constant 0 : i32
    return %c0_i32, %c0_i32_0 : i32, i32
  }
  func.func @transform_3(%arg0: i32) -> (i32, i32) {
    %c0_i32 = arith.constant 0 : i32
    %c0_i32_0 = arith.constant 0 : i32
    %c0_i32_1 = arith.constant 0 : i32
    return %c0_i32, %c0_i32_0 : i32, i32
  }
  func.func @transform_4(%arg0: i32) -> (i32, i32) {
    %c0_i32 = arith.constant 0 : i32
    %c0_i32_0 = arith.constant 0 : i32
    %c0_i32_1 = arith.constant 0 : i32
    return %c0_i32, %c0_i32_0 : i32, i32
  }
  func.func @transform_5(%arg0: i32) -> (i32, i32) {
    %c0_i32 = arith.constant 0 : i32
    %c0_i32_0 = arith.constant 0 : i32
    %c0_i32_1 = arith.constant 0 : i32
    return %c0_i32, %c0_i32_0 : i32, i32
  }
  func.func @transform_6(%arg0: i32) -> (i32, i32) {
    %c0_i32 = arith.constant 0 : i32
    %c0_i32_0 = arith.constant 0 : i32
    %c0_i32_1 = arith.constant 0 : i32
    return %c0_i32, %c0_i32_0 : i32, i32
  }
  func.func @transform_7(%arg0: i32) -> (i32, i32) {
    %c0_i32 = arith.constant 0 : i32
    %c0_i32_0 = arith.constant 0 : i32
    %c0_i32_1 = arith.constant 0 : i32
    return %c0_i32, %c0_i32_0 : i32, i32
  }
  func.func @transform_8(%arg0: i32) -> (i32, i32) {
    %c0_i32 = arith.constant 0 : i32
    %c0_i32_0 = arith.constant 0 : i32
    %c0_i32_1 = arith.constant 0 : i32
    return %c0_i32, %c0_i32_0 : i32, i32
  }
  func.func @transform_9(%arg0: i32) -> (i32, i32) {
    %c0_i32 = arith.constant 0 : i32
    %c0_i32_0 = arith.constant 0 : i32
    %c0_i32_1 = arith.constant 0 : i32
    return %c0_i32, %c0_i32_0 : i32, i32
  }
  func.func @transform_10(%arg0: i32) -> (i32, i32) {
    %c0_i32 = arith.constant 0 : i32
    %c0_i32_0 = arith.constant 0 : i32
    %c0_i32_1 = arith.constant 0 : i32
    return %c0_i32, %c0_i32_0 : i32, i32
  }
  func.func @transform_11(%arg0: i32) -> (i32, i32) {
    %c0_i32 = arith.constant 0 : i32
    %c0_i32_0 = arith.constant 0 : i32
    %c0_i32_1 = arith.constant 0 : i32
    return %c0_i32, %c0_i32_0 : i32, i32
  }
  func.func @transform_12(%arg0: i32) -> (i32, i32) {
    %c0_i32 = arith.constant 0 : i32
    %c0_i32_0 = arith.constant 0 : i32
    %c0_i32_1 = arith.constant 0 : i32
    return %c0_i32, %c0_i32_0 : i32, i32
  }
  func.func @transform_13(%arg0: i32) -> (i32, i32, i32) {
    %c0_i32 = arith.constant 0 : i32
    %c0_i32_0 = arith.constant 0 : i32
    %c0_i32_1 = arith.constant 0 : i32
    return %arg0, %c0_i32, %c0_i32_0 : i32, i32, i32
  }
  func.func @transform_14(%arg0: i32) -> (i32, i32, i32) {
    %c0_i32 = arith.constant 0 : i32
    %c0_i32_0 = arith.constant 0 : i32
    %c0_i32_1 = arith.constant 0 : i32
    return %arg0, %c0_i32, %c0_i32_0 : i32, i32, i32
  }
}

</mosaic_0001>

<llo_original>
// kernel: forward.1
$region0: #{forward.1}
  #allocation0 [shape = 'u32[]', space=smem, size = 0x4, offset = 0x4, fixed_abs, tag = 'smem constant byte address 0x4 - core index']
  #allocation1 [shape = 'u32[144,128]{1,0:T(1,128)}', space=vmem, size = 0x12000, scoped, tag = 'internal scratch']
  %s0 = inlined_call_operand.vmem [shape: f32[1,16,32], index: 0, kind: input, shape index: {}]
  %s1 = inlined_call_operand.hbm [shape: f32[32,384], index: 1, kind: input, shape index: {}]
  %s2 = inlined_call_operand.vmem [shape: f32[1,384], index: 2, kind: input, shape index: {}]
  %s3 = inlined_call_operand.vmem [shape: f32[128,128], index: 3, kind: input, shape index: {}]
  %s4 = inlined_call_operand.vmem [shape: f32[1,128], index: 4, kind: input, shape index: {}]
  %s5 = inlined_call_operand.vmem [shape: f32[8,128], index: 5, kind: input, shape index: {}, may-alias: {5,8}]
  %s6 = inlined_call_operand.vmem [shape: f32[8,16], index: 6, kind: input, shape index: {}]
  %s7 = inlined_call_operand.hbm [shape: f32[128,128], index: 7, kind: input, shape index: {}]
  %s8 = inlined_call_operand.vmem [shape: f32[8,128], index: 8, kind: input, shape index: {}, may-alias: {5,8}]
  %s9 = inlined_call_operand.hbm [shape: f32[128,32], index: 9, kind: input, shape index: {}]
  %s10 = inlined_call_operand.vmem [shape: f32[2,8], index: 10, kind: input, shape index: {}]
  %s11 = inlined_call_operand.vmem [shape: f32[16,8], index: 11, kind: input, shape index: {}]
  %s12 = inlined_call_operand.vmem [shape: f32[1,32], index: 12, kind: input, shape index: {}]
  %s13 = inlined_call_operand.hbm [shape: f32[1,2,32], index: 13, kind: output, shape index: {0}]
  %s14 = inlined_call_operand.vmem [shape: f32[1,8,8], index: 14, kind: output, shape index: {1}]
  %15 = xla_tuple %s13, %s14
  %s16 = sld [smem:[#allocation0]]
  $region82: #{forward.1} parent=0
    _
  %s18 = ssub.s32 1, %s16
  %s19 = scalar_select 0, %s18, %s16
  $region1: #{forward.1} parent=0
    #allocation2 [shape = 'u8[49152]{0}', space=vmem, size = 0xc000, scoped, tag = 'input window, operand 1, single buffered']
    #allocation3 [shape = 's32[1]{0}', space=sflag, size = 0x4, scoped, tag = 'scoped memory for forward.1']
    #allocation4 [shape = 's32[1]{0}', space=sflag, size = 0x4, scoped, tag = 'scoped memory for forward.1']
    #allocation5 [shape = 'u8[65536]{0}', space=vmem, size = 0x10000, scoped, tag = 'input window, operand 7, single buffered']
    #allocation6 [shape = 's32[1]{0}', space=sflag, size = 0x4, scoped, tag = 'scoped memory for forward.1']
    #allocation7 [shape = 'u8[65536]{0}', space=vmem, size = 0x10000, scoped, tag = 'input window, operand 9, single buffered']
    #allocation8 [shape = 'u8[1024]{0}', space=vmem, size = 0x400, scoped, tag = 'output window, operand 0, single buffered']
    %20 = vsyncpa [#allocation3], 0
    %21 = vsyncpa [#allocation6], 0
    %22 = vsyncpa [#allocation4], 0
    // Predicated region
    $region2: #{forward.1} parent=1 // pred_check
      _
    $region3: #{forward.1} parent=1 // pred_check_branch
      %24 = sbr.rel (0) target = $region5
    $region4: #{forward.1} parent=1 // pred_region
      _
    $region5: #{forward.1} parent=1 // pred_fallthru
      _
    // Predicated region
    $region6: #{forward.1} parent=1 // pred_check
      _
    $region7: #{forward.1} parent=1 // pred_check_branch
      %26 = sbr.rel (0) target = $region9
    $region8: #{forward.1} parent=1 // pred_region
      %s28 = ssub.s32 1536, 1536
      %29 = vsyncadd [#allocation3], %s28
      %s30 = sshll.u32 [#allocation2], 4
      %s31 = int_to_ptr.vmem [resolvable:$true] %s30
      %36 = dma.hbm_to_vmem [thread:$0]  %s1, 1536, %s31, [#allocation3], 384, 384, 24
    $region9: #{forward.1} parent=1 // pred_fallthru
      _
    // Predicated region
    $region10: #{forward.1} parent=1 // pred_check
      _
    $region11: #{forward.1} parent=1 // pred_check_branch
      %38 = sbr.rel (0) target = $region13
    $region12: #{forward.1} parent=1 // pred_region
      _
    $region13: #{forward.1} parent=1 // pred_fallthru
      _
    // Predicated region
    $region14: #{forward.1} parent=1 // pred_check
      _
    $region15: #{forward.1} parent=1 // pred_check_branch
      %40 = sbr.rel (0) target = $region17
    $region16: #{forward.1} parent=1 // pred_region
      _
    $region17: #{forward.1} parent=1 // pred_fallthru
      _
    // Predicated region
    $region18: #{forward.1} parent=1 // pred_check
      _
    $region19: #{forward.1} parent=1 // pred_check_branch
      %42 = sbr.rel (0) target = $region21
    $region20: #{forward.1} parent=1 // pred_region
      _
    $region21: #{forward.1} parent=1 // pred_fallthru
      _
    // Predicated region
    $region22: #{forward.1} parent=1 // pred_check
      _
    $region23: #{forward.1} parent=1 // pred_check_branch
      %44 = sbr.rel (0) target = $region25
    $region24: #{forward.1} parent=1 // pred_region
      _
    $region25: #{forward.1} parent=1 // pred_fallthru
      _
    // Predicated region
    $region26: #{forward.1} parent=1 // pred_check
      _
    $region27: #{forward.1} parent=1 // pred_check_branch
      %46 = sbr.rel (0) target = $region29
    $region28: #{forward.1} parent=1 // pred_region
      _
    $region29: #{forward.1} parent=1 // pred_fallthru
      _
    // Predicated region
    $region30: #{forward.1} parent=1 // pred_check
      _
    $region31: #{forward.1} parent=1 // pred_check_branch
      %48 = sbr.rel (0) target = $region33
    $region32: #{forward.1} parent=1 // pred_region
      %s50 = ssub.s32 2048, 2048
      %51 = vsyncadd [#allocation6], %s50
      %s52 = sshll.u32 [#allocation5], 4
      %s53 = int_to_ptr.vmem [resolvable:$true] %s52
      %58 = dma.hbm_to_vmem [thread:$0]  %s7, 2048, %s53, [#allocation6], 128, 128, 8
    $region33: #{forward.1} parent=1 // pred_fallthru
      _
    // Predicated region
    $region34: #{forward.1} parent=1 // pred_check
      _
    $region35: #{forward.1} parent=1 // pred_check_branch
      %60 = sbr.rel (0) target = $region37
    $region36: #{forward.1} parent=1 // pred_region
      _
    $region37: #{forward.1} parent=1 // pred_fallthru
      _
    // Predicated region
    $region38: #{forward.1} parent=1 // pred_check
      _
    $region39: #{forward.1} parent=1 // pred_check_branch
      %62 = sbr.rel (0) target = $region41
    $region40: #{forward.1} parent=1 // pred_region
      %s64 = ssub.s32 2048, 2048
      %65 = vsyncadd [#allocation6], %s64
      %s66 = sshll.u32 [#allocation7], 4
      %s67 = int_to_ptr.vmem [resolvable:$true] %s66
      %72 = dma.hbm_to_vmem [thread:$0]  %s9, 2048, %s67, [#allocation6], 128, 128, 8
    $region41: #{forward.1} parent=1 // pred_fallthru
      _
    // Predicated region
    $region42: #{forward.1} parent=1 // pred_check
      _
    $region43: #{forward.1} parent=1 // pred_check_branch
      %74 = sbr.rel (0) target = $region45
    $region44: #{forward.1} parent=1 // pred_region
      _
    $region45: #{forward.1} parent=1 // pred_fallthru
      _
    // Predicated region
    $region46: #{forward.1} parent=1 // pred_check
      _
    $region47: #{forward.1} parent=1 // pred_check_branch
      %76 = sbr.rel (0) target = $region49
    $region48: #{forward.1} parent=1 // pred_region
      _
    $region49: #{forward.1} parent=1 // pred_fallthru
      _
    // Predicated region
    $region50: #{forward.1} parent=1 // pred_check
      _
    $region51: #{forward.1} parent=1 // pred_check_branch
      %78 = sbr.rel (0) target = $region53
    $region52: #{forward.1} parent=1 // pred_region
      _
    $region53: #{forward.1} parent=1 // pred_fallthru
      _
    // Predicated region
    $region54: #{forward.1} parent=1 // pred_check
      _
    $region55: #{forward.1} parent=1 // pred_check_branch
      %80 = sbr.rel (0) target = $region57
    $region56: #{forward.1} parent=1 // pred_region
      %81 = dma.done [#allocation3], 1536
    $region57: #{forward.1} parent=1 // pred_fallthru
      _
    // Predicated region
    $region58: #{forward.1} parent=1 // pred_check
      _
    $region59: #{forward.1} parent=1 // pred_check_branch
      %83 = sbr.rel (0) target = $region61
    $region60: #{forward.1} parent=1 // pred_region
      %84 = dma.done [#allocation6], 2048
    $region61: #{forward.1} parent=1 // pred_fallthru
      _
    // Predicated region
    $region62: #{forward.1} parent=1 // pred_check
      _
    $region63: #{forward.1} parent=1 // pred_check_branch
      %86 = sbr.rel (0) target = $region65
    $region64: #{forward.1} parent=1 // pred_region
      %87 = dma.done [#allocation6], 2048
    $region65: #{forward.1} parent=1 // pred_fallthru
      _
    %v88 = vld [vmem:[%s0] sm:$0xff]
    %v89 = vld [vmem:[%s0 + $0x8] sm:$0xff]
    %v90 = vld [vmem:[#allocation2] sm:$0xff]
    %v91 = vld [vmem:[#allocation2 + $0x8] sm:$0xff]
    %v92 = vld [vmem:[#allocation2 + $0x10] sm:$0xff]
    %v93 = vld [vmem:[#allocation2 + $0x18] sm:$0xff]
    %v94 = vld [vmem:[#allocation2 + $0x20] sm:$0xff]
    %v95 = vld [vmem:[#allocation2 + $0x28] sm:$0xff]
    %v96 = vld [vmem:[#allocation2 + $0x30] sm:$0xff]
    %v97 = vld [vmem:[#allocation2 + $0x38] sm:$0xff]
    %v98 = vld [vmem:[#allocation2 + $0x40] sm:$0xff]
    %v99 = vld [vmem:[#allocation2 + $0x48] sm:$0xff]
    %v100 = vld [vmem:[#allocation2 + $0x50] sm:$0xff]
    %v101 = vld [vmem:[#allocation2 + $0x58] sm:$0xff]
    %v102 = vld [vmem:[%s2] sm:$0x7]
    %v104 = vlaneseq
    %v105 = vshrl.u32 %v104, 7
    %v106 = vsub.s32 0, %v105
    %v107 = vrot.slane %v102, %v106
    %v108 = vlaneseq
    %v109 = vshrl.u32 %v108, 7
    %v110 = vsub.s32 1, %v109
    %v111 = vrot.slane %v102, %v110
    %v112 = vlaneseq
    %v113 = vshrl.u32 %v112, 7
    %v114 = vsub.s32 2, %v113
    %v115 = vrot.slane %v102, %v114
    %vm119 = vcmask 261120
    %v121 = vsel %vm119, %v88, 0
    %v124 = vsel %vm119, %v89, 0
    %126 = vmatprep.subr.mxu0 %v91
    %127 = vmatpush1.msra.mxu0 %v90
    %128 = vmatprep.subr.mxu0 %v94
    %129 = vmatpush1.msra.mxu0 %v93
    %130 = vmatprep.subr.mxu0 %v97
    %131 = vmatpush1.msra.mxu0 %v96
    %132 = vmatprep.subr.mxu0 %v100
    %133 = vmatpush1.msra.mxu0 %v99
    %134 = vmatprep.subr.mxu0 0.0
    %135 = vmatpush1.msra.mxu0 0.0
    %136 = vmatprep.subr.mxu0 0.0
    %137 = vmatpush1.msra.mxu0 0.0
    %138 = vmatprep.subr.mxu0 0.0
    %139 = vmatpush1.msra.mxu0 0.0
    %140 = vmatprep.subr.mxu0 0.0
    %141 = vmatpush1.msra.mxu0 0.0
    %142 = vmatprep.subr.mxu0 0.0
    %143 = vmatpush1.msra.mxu0 0.0
    %144 = vmatprep.subr.mxu0 0.0
    %145 = vmatpush1.msra.mxu0 0.0
    %146 = vmatprep.subr.mxu0 0.0
    %147 = vmatpush1.msra.mxu0 0.0
    %148 = vmatprep.subr.mxu0 0.0
    %149 = vmatpush1.msra.mxu0 0.0
    %150 = vmatprep.subr.mxu0 0.0
    %151 = vmatpush1.msra.mxu0 0.0
    %152 = vmatprep.subr.mxu0 0.0
    %153 = vmatpush1.msra.mxu0 0.0
    %154 = vmatprep.subr.mxu0 0.0
    %155 = vmatpush1.msra.mxu0 0.0
    %156 = vmatprep.subr.mxu0 0.0
    %157 = vmatpush1.msra.mxu0 0.0
    %158 = vmatprep.subr.mxu0 0.0
    %159 = vmatpush1.msra.mxu0 0.0
    %160 = vmatprep.subr.mxu0 0.0
    %161 = vmatpush1.msra.mxu0 0.0
    %162 = vmatprep.subr.mxu0 0.0
    %163 = vmatpush1.msra.mxu0 0.0
    %164 = vmatprep.subr.mxu0 0.0
    %165 = vmatpush1.msra.mxu0 0.0
    %166 = vmatprep.subr.mxu0 0.0
    %167 = vmatpush1.msra.mxu0 0.0
    %168 = vmatprep.subr.mxu0 0.0
    %169 = vmatpush1.msra.mxu0 0.0
    %170 = vmatprep.subr.mxu0 0.0
    %171 = vmatpush1.msra.mxu0 0.0
    %172 = vmatprep.subr.mxu0 0.0
    %173 = vmatpush1.msra.mxu0 0.0
    %174 = vmatprep.subr.mxu0 0.0
    %175 = vmatpush1.msra.mxu0 0.0
    %176 = vmatprep.subr.mxu0 0.0
    %177 = vmatpush1.msra.mxu0 0.0
    %178 = vmatprep.subr.mxu0 0.0
    %179 = vmatpush1.msra.mxu0 0.0
    %180 = vmatprep.subr.mxu0 0.0
    %181 = vmatpush1.msra.mxu0 0.0
    %182 = vmatprep.subr.mxu0 0.0
    %183 = vmatpush1.msra.mxu0 0.0
    %184 = vmatprep.subr.mxu0 0.0
    %185 = vmatpush1.msra.mxu0 0.0
    %186 = vmatprep.subr.mxu0 0.0
    %187 = vmatpush1.msra.mxu0 0.0
    %188 = vmatprep.subr.mxu0 0.0
    %189 = vmatpush1.msra.mxu0 0.0
    %190 = vmatprep.mubr.f32.mxu0 0.0
    %191 = vmatmul.mubr.f32.gmra.mrb[0].mxu0 %v121
    %v192 = vpop.f32.mrb[0].mxu0
    %v193 = vadd.f32 %v107, %v192
    %v194 = vpop.f32.mrb[0].mxu0
    %v195 = vadd.f32 %v111, %v194
    %196 = vmatprep.mubr.f32.mxu0 0.0
    %197 = vmatmul.mubr.f32.gmra.mrb[0].mxu0 %v124
    %v198 = vpop.f32.mrb[0].mxu0
    %v199 = vadd.f32 %v107, %v198
    %v200 = vpop.f32.mrb[0].mxu0
    %v201 = vadd.f32 %v111, %v200
    %202 = vdwg.mxu0
    %203 = vmatprep.subr.mxu0 0.0
    %204 = vmatpush1.msra.mxu0 %v92
    %205 = vmatprep.subr.mxu0 0.0
    %206 = vmatpush1.msra.mxu0 %v95
    %207 = vmatprep.subr.mxu0 0.0
    %208 = vmatpush1.msra.mxu0 %v98
    %209 = vmatprep.subr.mxu0 0.0
    %210 = vmatpush1.msra.mxu0 %v101
    %211 = vmatprep.subr.mxu0 0.0
    %212 = vmatpush1.msra.mxu0 0.0
    %213 = vmatprep.subr.mxu0 0.0
    %214 = vmatpush1.msra.mxu0 0.0
    %215 = vmatprep.subr.mxu0 0.0
    %216 = vmatpush1.msra.mxu0 0.0
    %217 = vmatprep.subr.mxu0 0.0
    %218 = vmatpush1.msra.mxu0 0.0
    %219 = vmatprep.subr.mxu0 0.0
    %220 = vmatpush1.msra.mxu0 0.0
    %221 = vmatprep.subr.mxu0 0.0
    %222 = vmatpush1.msra.mxu0 0.0
    %223 = vmatprep.subr.mxu0 0.0
    %224 = vmatpush1.msra.mxu0 0.0
    %225 = vmatprep.subr.mxu0 0.0
    %226 = vmatpush1.msra.mxu0 0.0
    %227 = vmatprep.subr.mxu0 0.0
    %228 = vmatpush1.msra.mxu0 0.0
    %229 = vmatprep.subr.mxu0 0.0
    %230 = vmatpush1.msra.mxu0 0.0
    %231 = vmatprep.subr.mxu0 0.0
    %232 = vmatpush1.msra.mxu0 0.0
    %233 = vmatprep.subr.mxu0 0.0
    %234 = vmatpush1.msra.mxu0 0.0
    %235 = vmatprep.subr.mxu0 0.0
    %236 = vmatpush1.msra.mxu0 0.0
    %237 = vmatprep.subr.mxu0 0.0
    %238 = vmatpush1.msra.mxu0 0.0
    %239 = vmatprep.subr.mxu0 0.0
    %240 = vmatpush1.msra.mxu0 0.0
    %241 = vmatprep.subr.mxu0 0.0
    %242 = vmatpush1.msra.mxu0 0.0
    %243 = vmatprep.subr.mxu0 0.0
    %244 = vmatpush1.msra.mxu0 0.0
    %245 = vmatprep.subr.mxu0 0.0
    %246 = vmatpush1.msra.mxu0 0.0
    %247 = vmatprep.subr.mxu0 0.0
    %248 = vmatpush1.msra.mxu0 0.0
    %249 = vmatprep.subr.mxu0 0.0
    %250 = vmatpush1.msra.mxu0 0.0
    %251 = vmatprep.subr.mxu0 0.0
    %252 = vmatpush1.msra.mxu0 0.0
    %253 = vmatprep.subr.mxu0 0.0
    %254 = vmatpush1.msra.mxu0 0.0
    %255 = vmatprep.subr.mxu0 0.0
    %256 = vmatpush1.msra.mxu0 0.0
    %257 = vmatprep.subr.mxu0 0.0
    %258 = vmatpush1.msra.mxu0 0.0
    %259 = vmatprep.subr.mxu0 0.0
    %260 = vmatpush1.msra.mxu0 0.0
    %261 = vmatprep.subr.mxu0 0.0
    %262 = vmatpush1.msra.mxu0 0.0
    %263 = vmatprep.subr.mxu0 0.0
    %264 = vmatpush1.msra.mxu0 0.0
    %265 = vmatprep.subr.mxu0 0.0
    %266 = vmatpush1.msra.mxu0 0.0
    %267 = vmatprep.mubr.f32.mxu0 0.0
    %268 = vmatmul.mubr.f32.gmra.mrb[0].mxu0 %v121
    %v269 = vpop.f32.mrb[0].mxu0
    %v270 = vadd.f32 %v115, %v269
    %v271 = vpop.f32.mrb[0].mxu0
    %272 = vmatprep.mubr.f32.mxu0 0.0
    %273 = vmatmul.mubr.f32.gmra.mrb[0].mxu0 %v124
    %v274 = vpop.f32.mrb[0].mxu0
    %v275 = vadd.f32 %v115, %v274
    %v276 = vpop.f32.mrb[0].mxu0
    %277 = vdwg.mxu0
    %v278 = vld [vmem:[%s6] sm:$0xff]
    %vm279 = vcmask 130048
    %v281 = vsel %vm279, %v278, 0
    %283 = vmatprep.subr.mxu0 0.0
    %284 = vmatpush1.msra.mxu0 %v193
    %285 = vmatprep.subr.mxu0 0.0
    %286 = vmatpush1.msra.mxu0 %v199
    %287 = vmatprep.subr.mxu0 0.0
    %288 = vmatpush1.msra.mxu0 0.0
    %289 = vmatprep.subr.mxu0 0.0
    %290 = vmatpush1.msra.mxu0 0.0
    %291 = vmatprep.subr.mxu0 0.0
    %292 = vmatpush1.msra.mxu0 0.0
    %293 = vmatprep.subr.mxu0 0.0
    %294 = vmatpush1.msra.mxu0 0.0
    %295 = vmatprep.subr.mxu0 0.0
    %296 = vmatpush1.msra.mxu0 0.0
    %297 = vmatprep.subr.mxu0 0.0
    %298 = vmatpush1.msra.mxu0 0.0
    %299 = vmatprep.subr.mxu0 0.0
    %300 = vmatpush1.msra.mxu0 0.0
    %301 = vmatprep.subr.mxu0 0.0
    %302 = vmatpush1.msra.mxu0 0.0
    %303 = vmatprep.subr.mxu0 0.0
    %304 = vmatpush1.msra.mxu0 0.0
    %305 = vmatprep.subr.mxu0 0.0
    %306 = vmatpush1.msra.mxu0 0.0
    %307 = vmatprep.subr.mxu0 0.0
    %308 = vmatpush1.msra.mxu0 0.0
    %309 = vmatprep.subr.mxu0 0.0
    %310 = vmatpush1.msra.mxu0 0.0
    %311 = vmatprep.subr.mxu0 0.0
    %312 = vmatpush1.msra.mxu0 0.0
    %313 = vmatprep.subr.mxu0 0.0
    %314 = vmatpush1.msra.mxu0 0.0
    %315 = vmatprep.subr.mxu0 0.0
    %316 = vmatpush1.msra.mxu0 0.0
    %317 = vmatprep.subr.mxu0 0.0
    %318 = vmatpush1.msra.mxu0 0.0
    %319 = vmatprep.subr.mxu0 0.0
    %320 = vmatpush1.msra.mxu0 0.0
    %321 = vmatprep.subr.mxu0 0.0
    %322 = vmatpush1.msra.mxu0 0.0
    %323 = vmatprep.subr.mxu0 0.0
    %324 = vmatpush1.msra.mxu0 0.0
    %325 = vmatprep.subr.mxu0 0.0
    %326 = vmatpush1.msra.mxu0 0.0
    %327 = vmatprep.subr.mxu0 0.0
    %328 = vmatpush1.msra.mxu0 0.0
    %329 = vmatprep.subr.mxu0 0.0
    %330 = vmatpush1.msra.mxu0 0.0
    %331 = vmatprep.subr.mxu0 0.0
    %332 = vmatpush1.msra.mxu0 0.0
    %333 = vmatprep.subr.mxu0 0.0
    %334 = vmatpush1.msra.mxu0 0.0
    %335 = vmatprep.subr.mxu0 0.0
    %336 = vmatpush1.msra.mxu0 0.0
    %337 = vmatprep.subr.mxu0 0.0
    %338 = vmatpush1.msra.mxu0 0.0
    %339 = vmatprep.subr.mxu0 0.0
    %340 = vmatpush1.msra.mxu0 0.0
    %341 = vmatprep.subr.mxu0 0.0
    %342 = vmatpush1.msra.mxu0 0.0
    %343 = vmatprep.subr.mxu0 0.0
    %344 = vmatpush1.msra.mxu0 0.0
    %345 = vmatprep.subr.mxu0 0.0
    %346 = vmatpush1.msra.mxu0 0.0
    %347 = vmatprep.mubr.f32.mxu0 0.0
    %348 = vmatmul.mubr.f32.gmra.mrb[0].mxu0 %v281
    %v349 = vpop.f32.mrb[0].mxu0
    %v350 = vadd.f32 0.0, %v349
    %v351 = vpop.f32.mrb[0].mxu0
    %352 = vdwg.mxu0
    %v353 = vmul.f32 %v350, 0.125
    %v354 = vld [vmem:[%s3] sm:$0xff]
    %v355 = vld [vmem:[%s3 + $0x8] sm:$0xff]
    %v356 = vld [vmem:[%s3 + $0x10] sm:$0xff]
    %v357 = vld [vmem:[%s3 + $0x18] sm:$0xff]
    %v358 = vld [vmem:[%s3 + $0x20] sm:$0xff]
    %v359 = vld [vmem:[%s3 + $0x28] sm:$0xff]
    %v360 = vld [vmem:[%s3 + $0x30] sm:$0xff]
    %v361 = vld [vmem:[%s3 + $0x38] sm:$0xff]
    %v362 = vld [vmem:[%s3 + $0x40] sm:$0xff]
    %v363 = vld [vmem:[%s3 + $0x48] sm:$0xff]
    %v364 = vld [vmem:[%s3 + $0x50] sm:$0xff]
    %v365 = vld [vmem:[%s3 + $0x58] sm:$0xff]
    %v366 = vld [vmem:[%s3 + $0x60] sm:$0xff]
    %v367 = vld [vmem:[%s3 + $0x68] sm:$0xff]
    %v368 = vld [vmem:[%s3 + $0x70] sm:$0xff]
    %v369 = vld [vmem:[%s3 + $0x78] sm:$0xff]
    %v370 = vld [vmem:[%s4] sm:$0x1]
    %v372 = vlaneseq
    %v373 = vshrl.u32 %v372, 7
    %v374 = vsub.s32 0, %v373
    %v375 = vrot.slane %v370, %v374
    %377 = vmatprep.subr.mxu0 0.0
    %378 = vmatpush1.msra.mxu0 %v354
    %379 = vmatprep.subr.mxu0 0.0
    %380 = vmatpush1.msra.mxu0 %v355
    %381 = vmatprep.subr.mxu0 0.0
    %382 = vmatpush1.msra.mxu0 %v356
    %383 = vmatprep.subr.mxu0 0.0
    %384 = vmatpush1.msra.mxu0 %v357
    %385 = vmatprep.subr.mxu0 0.0
    %386 = vmatpush1.msra.mxu0 %v358
    %387 = vmatprep.subr.mxu0 0.0
    %388 = vmatpush1.msra.mxu0 %v359
    %389 = vmatprep.subr.mxu0 0.0
    %390 = vmatpush1.msra.mxu0 %v360
    %391 = vmatprep.subr.mxu0 0.0
    %392 = vmatpush1.msra.mxu0 %v361
    %393 = vmatprep.subr.mxu0 0.0
    %394 = vmatpush1.msra.mxu0 %v362
    %395 = vmatprep.subr.mxu0 0.0
    %396 = vmatpush1.msra.mxu0 %v363
    %397 = vmatprep.subr.mxu0 0.0
    %398 = vmatpush1.msra.mxu0 %v364
    %399 = vmatprep.subr.mxu0 0.0
    %400 = vmatpush1.msra.mxu0 %v365
    %401 = vmatprep.subr.mxu0 0.0
    %402 = vmatpush1.msra.mxu0 %v366
    %403 = vmatprep.subr.mxu0 0.0
    %404 = vmatpush1.msra.mxu0 %v367
    %405 = vmatprep.subr.mxu0 0.0
    %406 = vmatpush1.msra.mxu0 %v368
    %407 = vmatprep.subr.mxu0 0.0
    %408 = vmatpush1.msra.mxu0 %v369
    %409 = vmatprep.subr.mxu0 0.0
    %410 = vmatpush1.msra.mxu0 0.0
    %411 = vmatprep.subr.mxu0 0.0
    %412 = vmatpush1.msra.mxu0 0.0
    %413 = vmatprep.subr.mxu0 0.0
    %414 = vmatpush1.msra.mxu0 0.0
    %415 = vmatprep.subr.mxu0 0.0
    %416 = vmatpush1.msra.mxu0 0.0
    %417 = vmatprep.subr.mxu0 0.0
    %418 = vmatpush1.msra.mxu0 0.0
    %419 = vmatprep.subr.mxu0 0.0
    %420 = vmatpush1.msra.mxu0 0.0
    %421 = vmatprep.subr.mxu0 0.0
    %422 = vmatpush1.msra.mxu0 0.0
    %423 = vmatprep.subr.mxu0 0.0
    %424 = vmatpush1.msra.mxu0 0.0
    %425 = vmatprep.subr.mxu0 0.0
    %426 = vmatpush1.msra.mxu0 0.0
    %427 = vmatprep.subr.mxu0 0.0
    %428 = vmatpush1.msra.mxu0 0.0
    %429 = vmatprep.subr.mxu0 0.0
    %430 = vmatpush1.msra.mxu0 0.0
    %431 = vmatprep.subr.mxu0 0.0
    %432 = vmatpush1.msra.mxu0 0.0
    %433 = vmatprep.subr.mxu0 0.0
    %434 = vmatpush1.msra.mxu0 0.0
    %435 = vmatprep.subr.mxu0 0.0
    %436 = vmatpush1.msra.mxu0 0.0
    %437 = vmatprep.subr.mxu0 0.0
    %438 = vmatpush1.msra.mxu0 0.0
    %439 = vmatprep.subr.mxu0 0.0
    %440 = vmatpush1.msra.mxu0 0.0
    %441 = vmatprep.mubr.f32.mxu0 0.0
    %442 = vmatmul.mubr.f32.gmra.mrb[0].mxu0 %v353
    %v443 = vpop.f32.mrb[0].mxu0
    %v444 = vadd.f32 %v375, %v443
    %v445 = vpop.f32.mrb[0].mxu0
    %446 = vdwg.mxu0
    %v447 = vld [vmem:[%s5] sm:$0xff]
    %v448 = vmul.f32 %v444, %v447
    %449 = vmatprep.subr.mxu0 0.0
    %450 = vmatpush1.xpose.msra.mxu0 %v195
    %451 = vmatprep.subr.mxu0 0.0
    %452 = vmatpush1.xpose.msra.mxu0 %v201
    %453 = vmatprep.subr.mxu0 0.0
    %454 = vmatpush1.xpose.msra.mxu0 0.0
    %455 = vmatprep.subr.mxu0 0.0
    %456 = vmatpush1.xpose.msra.mxu0 0.0
    %457 = vmatprep.subr.mxu0 0.0
    %458 = vmatpush1.xpose.msra.mxu0 0.0
    %459 = vmatprep.subr.mxu0 0.0
    %460 = vmatpush1.xpose.msra.mxu0 0.0
    %461 = vmatprep.subr.mxu0 0.0
    %462 = vmatpush1.xpose.msra.mxu0 0.0
    %463 = vmatprep.subr.mxu0 0.0
    %464 = vmatpush1.xpose.msra.mxu0 0.0
    %465 = vmatprep.subr.mxu0 0.0
    %466 = vmatpush1.xpose.msra.mxu0 0.0
    %467 = vmatprep.subr.mxu0 0.0
    %468 = vmatpush1.xpose.msra.mxu0 0.0
    %469 = vmatprep.subr.mxu0 0.0
    %470 = vmatpush1.xpose.msra.mxu0 0.0
    %471 = vmatprep.subr.mxu0 0.0
    %472 = vmatpush1.xpose.msra.mxu0 0.0
    %473 = vmatprep.subr.mxu0 0.0
    %474 = vmatpush1.xpose.msra.mxu0 0.0
    %475 = vmatprep.subr.mxu0 0.0
    %476 = vmatpush1.xpose.msra.mxu0 0.0
    %477 = vmatprep.subr.mxu0 0.0
    %478 = vmatpush1.xpose.msra.mxu0 0.0
    %479 = vmatprep.subr.mxu0 0.0
    %480 = vmatpush1.xpose.msra.mxu0 0.0
    %481 = vmatprep.subr.mxu0 0.0
    %482 = vmatpush1.xpose.msra.mxu0 0.0
    %483 = vmatprep.subr.mxu0 0.0
    %484 = vmatpush1.xpose.msra.mxu0 0.0
    %485 = vmatprep.subr.mxu0 0.0
    %486 = vmatpush1.xpose.msra.mxu0 0.0
    %487 = vmatprep.subr.mxu0 0.0
    %488 = vmatpush1.xpose.msra.mxu0 0.0
    %489 = vmatprep.subr.mxu0 0.0
    %490 = vmatpush1.xpose.msra.mxu0 0.0
    %491 = vmatprep.subr.mxu0 0.0
    %492 = vmatpush1.xpose.msra.mxu0 0.0
    %493 = vmatprep.subr.mxu0 0.0
    %494 = vmatpush1.xpose.msra.mxu0 0.0
    %495 = vmatprep.subr.mxu0 0.0
    %496 = vmatpush1.xpose.msra.mxu0 0.0
    %497 = vmatprep.subr.mxu0 0.0
    %498 = vmatpush1.xpose.msra.mxu0 0.0
    %499 = vmatprep.subr.mxu0 0.0
    %500 = vmatpush1.xpose.msra.mxu0 0.0
    %501 = vmatprep.subr.mxu0 0.0
    %502 = vmatpush1.xpose.msra.mxu0 0.0
    %503 = vmatprep.subr.mxu0 0.0
    %504 = vmatpush1.xpose.msra.mxu0 0.0
    %505 = vmatprep.subr.mxu0 0.0
    %506 = vmatpush1.xpose.msra.mxu0 0.0
    %507 = vmatprep.subr.mxu0 0.0
    %508 = vmatpush1.xpose.msra.mxu0 0.0
    %509 = vmatprep.subr.mxu0 0.0
    %510 = vmatpush1.xpose.msra.mxu0 0.0
    %511 = vmatprep.subr.mxu0 0.0
    %512 = vmatpush1.xpose.msra.mxu0 0.0
    %513 = vmatprep.mubr.f32.mxu0 0.0
    %514 = vmatmul.mubr.f32.gmra.mrb[0].mxu0 %v448
    %v515 = vpop.f32.mrb[0].mxu0
    %v516 = vadd.f32 0.0, %v515
    %v517 = vpop.f32.mrb[0].mxu0
    %518 = vdwg.mxu0
    %v519 = vmul.f32 %v516, 0.17677669
    %vm520 = vcmp.gt.f32.partialorder %v278, 0.0
    %v521 = vsel %vm520, %v519, -inf
    %v522 = vsel %vm279, %v521, -inf
    %523 = vmax.xlane.f32.xlu0 %v522
    %v524 = vpop.xlane.xlu0 %523
    %v525 = vsub.f32 %v521, %v524
    %v526 = vmul.f32 %v525, 1.442695
    %v527 = vpow.pop %v526
    %v528 = vsel %vm279, %v527, 0.0
    %529 = vadd.xlane.f32.xlu0 %v528
    %v530 = vpop.xlane.xlu0 %529
    %v531 = vrcp.pop %v530
    %v532 = vmul.f32 %v527, %v531
    %v533 = vld [vmem:[%s11] sm:$0xff]
    %v534 = vld [vmem:[%s11 + $0x8] sm:$0xff]
    %535 = vxpose.xlu0.b32.start [1/16] %v533, 128
    %536 = vxpose.xlu0.b32.cont [2/16] %v534, 128
    %537 = vxpose.xlu0.b32.cont [3/16] 0.0, 128
    %538 = vxpose.xlu0.b32.cont [4/16] 0.0, 128
    %539 = vxpose.xlu0.b32.cont [5/16] 0.0, 128
    %540 = vxpose.xlu0.b32.cont [6/16] 0.0, 128
    %541 = vxpose.xlu0.b32.cont [7/16] 0.0, 128
    %542 = vxpose.xlu0.b32.cont [8/16] 0.0, 128
    %543 = vxpose.xlu0.b32.cont [9/16] 0.0, 128
    %544 = vxpose.xlu0.b32.cont [10/16] 0.0, 128
    %545 = vxpose.xlu0.b32.cont [11/16] 0.0, 128
    %546 = vxpose.xlu0.b32.cont [12/16] 0.0, 128
    %547 = vxpose.xlu0.b32.cont [13/16] 0.0, 128
    %548 = vxpose.xlu0.b32.cont [14/16] 0.0, 128
    %549 = vxpose.xlu0.b32.cont [15/16] 0.0, 128
    %550 = vxpose.xlu0.b32.end [16/16] 0.0, 128
    %v551 = vpop.trf.xlu0
    %v552 = vpop.trf.xlu0
    %v553 = vpop.trf.xlu0
    %v554 = vpop.trf.xlu0
    %v555 = vpop.trf.xlu0
    %v556 = vpop.trf.xlu0
    %v557 = vpop.trf.xlu0
    %v558 = vpop.trf.xlu0
    %v559 = vpop.trf.xlu0
    %v560 = vpop.trf.xlu0
    %v561 = vpop.trf.xlu0
    %v562 = vpop.trf.xlu0
    %v563 = vpop.trf.xlu0
    %v564 = vpop.trf.xlu0
    %v565 = vpop.trf.xlu0
    %v566 = vpop.trf.xlu0
    %v568 = vsel %vm279, %v551, 0
    %v571 = vsel %vm279, %v532, 0
    %573 = vmatprep.subr.mxu0 0.0
    %574 = vmatpush1.xpose.msra.mxu0 %v571
    %575 = vmatprep.subr.mxu0 0.0
    %576 = vmatpush1.xpose.msra.mxu0 0.0
    %577 = vmatprep.subr.mxu0 0.0
    %578 = vmatpush1.xpose.msra.mxu0 0.0
    %579 = vmatprep.subr.mxu0 0.0
    %580 = vmatpush1.xpose.msra.mxu0 0.0
    %581 = vmatprep.subr.mxu0 0.0
    %582 = vmatpush1.xpose.msra.mxu0 0.0
    %583 = vmatprep.subr.mxu0 0.0
    %584 = vmatpush1.xpose.msra.mxu0 0.0
    %585 = vmatprep.subr.mxu0 0.0
    %586 = vmatpush1.xpose.msra.mxu0 0.0
    %587 = vmatprep.subr.mxu0 0.0
    %588 = vmatpush1.xpose.msra.mxu0 0.0
    %589 = vmatprep.subr.mxu0 0.0
    %590 = vmatpush1.xpose.msra.mxu0 0.0
    %591 = vmatprep.subr.mxu0 0.0
    %592 = vmatpush1.xpose.msra.mxu0 0.0
    %593 = vmatprep.subr.mxu0 0.0
    %594 = vmatpush1.xpose.msra.mxu0 0.0
    %595 = vmatprep.subr.mxu0 0.0
    %596 = vmatpush1.xpose.msra.mxu0 0.0
    %597 = vmatprep.subr.mxu0 0.0
    %598 = vmatpush1.xpose.msra.mxu0 0.0
    %599 = vmatprep.subr.mxu0 0.0
    %600 = vmatpush1.xpose.msra.mxu0 0.0
    %601 = vmatprep.subr.mxu0 0.0
    %602 = vmatpush1.xpose.msra.mxu0 0.0
    %603 = vmatprep.subr.mxu0 0.0
    %604 = vmatpush1.xpose.msra.mxu0 0.0
    %605 = vmatprep.subr.mxu0 0.0
    %606 = vmatpush1.xpose.msra.mxu0 0.0
    %607 = vmatprep.subr.mxu0 0.0
    %608 = vmatpush1.xpose.msra.mxu0 0.0
    %609 = vmatprep.subr.mxu0 0.0
    %610 = vmatpush1.xpose.msra.mxu0 0.0
    %611 = vmatprep.subr.mxu0 0.0
    %612 = vmatpush1.xpose.msra.mxu0 0.0
    %613 = vmatprep.subr.mxu0 0.0
    %614 = vmatpush1.xpose.msra.mxu0 0.0
    %615 = vmatprep.subr.mxu0 0.0
    %616 = vmatpush1.xpose.msra.mxu0 0.0
    %617 = vmatprep.subr.mxu0 0.0
    %618 = vmatpush1.xpose.msra.mxu0 0.0
    %619 = vmatprep.subr.mxu0 0.0
    %620 = vmatpush1.xpose.msra.mxu0 0.0
    %621 = vmatprep.subr.mxu0 0.0
    %622 = vmatpush1.xpose.msra.mxu0 0.0
    %623 = vmatprep.subr.mxu0 0.0
    %624 = vmatpush1.xpose.msra.mxu0 0.0
    %625 = vmatprep.subr.mxu0 0.0
    %626 = vmatpush1.xpose.msra.mxu0 0.0
    %627 = vmatprep.subr.mxu0 0.0
    %628 = vmatpush1.xpose.msra.mxu0 0.0
    %629 = vmatprep.subr.mxu0 0.0
    %630 = vmatpush1.xpose.msra.mxu0 0.0
    %631 = vmatprep.subr.mxu0 0.0
    %632 = vmatpush1.xpose.msra.mxu0 0.0
    %633 = vmatprep.subr.mxu0 0.0
    %634 = vmatpush1.xpose.msra.mxu0 0.0
    %635 = vmatprep.subr.mxu0 0.0
    %636 = vmatpush1.xpose.msra.mxu0 0.0
    %637 = vmatprep.mubr.f32.mxu0 0.0
    %638 = vmatmul.mubr.f32.gmra.mrb[0].mxu0 %v568
    %v639 = vpop.f32.mrb[0].mxu0
    %v640 = vadd.f32 0.0, %v639
    %v641 = vpop.f32.mrb[0].mxu0
    %642 = vdwg.mxu0
    %vm643 = vcmask 64512
    %644 = vst.msk [vmem:[%s14] sm:$0xff] %vm643, %v640
    %v645 = vld [vmem:[#allocation5] sm:$0xff]
    %v646 = vld [vmem:[#allocation5 + $0x8] sm:$0xff]
    %v647 = vld [vmem:[#allocation5 + $0x10] sm:$0xff]
    %v648 = vld [vmem:[#allocation5 + $0x18] sm:$0xff]
    %v649 = vld [vmem:[#allocation5 + $0x20] sm:$0xff]
    %v650 = vld [vmem:[#allocation5 + $0x28] sm:$0xff]
    %v651 = vld [vmem:[#allocation5 + $0x30] sm:$0xff]
    %v652 = vld [vmem:[#allocation5 + $0x38] sm:$0xff]
    %v653 = vld [vmem:[#allocation5 + $0x40] sm:$0xff]
    %v654 = vld [vmem:[#allocation5 + $0x48] sm:$0xff]
    %v655 = vld [vmem:[#allocation5 + $0x50] sm:$0xff]
    %v656 = vld [vmem:[#allocation5 + $0x58] sm:$0xff]
    %v657 = vld [vmem:[#allocation5 + $0x60] sm:$0xff]
    %v658 = vld [vmem:[#allocation5 + $0x68] sm:$0xff]
    %v659 = vld [vmem:[#allocation5 + $0x70] sm:$0xff]
    %v660 = vld [vmem:[#allocation5 + $0x78] sm:$0xff]
    %661 = vmatprep.subr.mxu0 0.0
    %662 = vmatpush1.msra.mxu0 %v645
    %663 = vmatprep.subr.mxu0 0.0
    %664 = vmatpush1.msra.mxu0 %v646
    %665 = vmatprep.subr.mxu0 0.0
    %666 = vmatpush1.msra.mxu0 %v647
    %667 = vmatprep.subr.mxu0 0.0
    %668 = vmatpush1.msra.mxu0 %v648
    %669 = vmatprep.subr.mxu0 0.0
    %670 = vmatpush1.msra.mxu0 %v649
    %671 = vmatprep.subr.mxu0 0.0
    %672 = vmatpush1.msra.mxu0 %v650
    %673 = vmatprep.subr.mxu0 0.0
    %674 = vmatpush1.msra.mxu0 %v651
    %675 = vmatprep.subr.mxu0 0.0
    %676 = vmatpush1.msra.mxu0 %v652
    %677 = vmatprep.subr.mxu0 0.0
    %678 = vmatpush1.msra.mxu0 %v653
    %679 = vmatprep.subr.mxu0 0.0
    %680 = vmatpush1.msra.mxu0 %v654
    %681 = vmatprep.subr.mxu0 0.0
    %682 = vmatpush1.msra.mxu0 %v655
    %683 = vmatprep.subr.mxu0 0.0
    %684 = vmatpush1.msra.mxu0 %v656
    %685 = vmatprep.subr.mxu0 0.0
    %686 = vmatpush1.msra.mxu0 %v657
    %687 = vmatprep.subr.mxu0 0.0
    %688 = vmatpush1.msra.mxu0 %v658
    %689 = vmatprep.subr.mxu0 0.0
    %690 = vmatpush1.msra.mxu0 %v659
    %691 = vmatprep.subr.mxu0 0.0
    %692 = vmatpush1.msra.mxu0 %v660
    %693 = vmatprep.subr.mxu0 0.0
    %694 = vmatpush1.msra.mxu0 0.0
    %695 = vmatprep.subr.mxu0 0.0
    %696 = vmatpush1.msra.mxu0 0.0
    %697 = vmatprep.subr.mxu0 0.0
    %698 = vmatpush1.msra.mxu0 0.0
    %699 = vmatprep.subr.mxu0 0.0
    %700 = vmatpush1.msra.mxu0 0.0
    %701 = vmatprep.subr.mxu0 0.0
    %702 = vmatpush1.msra.mxu0 0.0
    %703 = vmatprep.subr.mxu0 0.0
    %704 = vmatpush1.msra.mxu0 0.0
    %705 = vmatprep.subr.mxu0 0.0
    %706 = vmatpush1.msra.mxu0 0.0
    %707 = vmatprep.subr.mxu0 0.0
    %708 = vmatpush1.msra.mxu0 0.0
    %709 = vmatprep.subr.mxu0 0.0
    %710 = vmatpush1.msra.mxu0 0.0
    %711 = vmatprep.subr.mxu0 0.0
    %712 = vmatpush1.msra.mxu0 0.0
    %713 = vmatprep.subr.mxu0 0.0
    %714 = vmatpush1.msra.mxu0 0.0
    %715 = vmatprep.subr.mxu0 0.0
    %716 = vmatpush1.msra.mxu0 0.0
    %717 = vmatprep.subr.mxu0 0.0
    %718 = vmatpush1.msra.mxu0 0.0
    %719 = vmatprep.subr.mxu0 0.0
    %720 = vmatpush1.msra.mxu0 0.0
    %721 = vmatprep.subr.mxu0 0.0
    %722 = vmatpush1.msra.mxu0 0.0
    %723 = vmatprep.subr.mxu0 0.0
    %724 = vmatpush1.msra.mxu0 0.0
    %725 = vmatprep.mubr.f32.mxu0 0.0
    %726 = vmatmul.mubr.f32.gmra.mrb[0].mxu0 %v270
    %v727 = vpop.f32.mrb[0].mxu0
    %v728 = vadd.f32 0.0, %v727
    %v729 = vpop.f32.mrb[0].mxu0
    %730 = vmatprep.mubr.f32.mxu0 0.0
    %731 = vmatmul.mubr.f32.gmra.mrb[0].mxu0 %v275
    %v732 = vpop.f32.mrb[0].mxu0
    %v733 = vadd.f32 0.0, %v732
    %v734 = vpop.f32.mrb[0].mxu0
    %735 = vdwg.mxu0
    %736 = vmatprep.subr.mxu0 0.0
    %737 = vmatpush1.msra.mxu0 %v728
    %738 = vmatprep.subr.mxu0 0.0
    %739 = vmatpush1.msra.mxu0 %v733
    %740 = vmatprep.subr.mxu0 0.0
    %741 = vmatpush1.msra.mxu0 0.0
    %742 = vmatprep.subr.mxu0 0.0
    %743 = vmatpush1.msra.mxu0 0.0
    %744 = vmatprep.subr.mxu0 0.0
    %745 = vmatpush1.msra.mxu0 0.0
    %746 = vmatprep.subr.mxu0 0.0
    %747 = vmatpush1.msra.mxu0 0.0
    %748 = vmatprep.subr.mxu0 0.0
    %749 = vmatpush1.msra.mxu0 0.0
    %750 = vmatprep.subr.mxu0 0.0
    %751 = vmatpush1.msra.mxu0 0.0
    %752 = vmatprep.subr.mxu0 0.0
    %753 = vmatpush1.msra.mxu0 0.0
    %754 = vmatprep.subr.mxu0 0.0
    %755 = vmatpush1.msra.mxu0 0.0
    %756 = vmatprep.subr.mxu0 0.0
    %757 = vmatpush1.msra.mxu0 0.0
    %758 = vmatprep.subr.mxu0 0.0
    %759 = vmatpush1.msra.mxu0 0.0
    %760 = vmatprep.subr.mxu0 0.0
    %761 = vmatpush1.msra.mxu0 0.0
    %762 = vmatprep.subr.mxu0 0.0
    %763 = vmatpush1.msra.mxu0 0.0
    %764 = vmatprep.subr.mxu0 0.0
    %765 = vmatpush1.msra.mxu0 0.0
    %766 = vmatprep.subr.mxu0 0.0
    %767 = vmatpush1.msra.mxu0 0.0
    %768 = vmatprep.subr.mxu0 0.0
    %769 = vmatpush1.msra.mxu0 0.0
    %770 = vmatprep.subr.mxu0 0.0
    %771 = vmatpush1.msra.mxu0 0.0
    %772 = vmatprep.subr.mxu0 0.0
    %773 = vmatpush1.msra.mxu0 0.0
    %774 = vmatprep.subr.mxu0 0.0
    %775 = vmatpush1.msra.mxu0 0.0
    %776 = vmatprep.subr.mxu0 0.0
    %777 = vmatpush1.msra.mxu0 0.0
    %778 = vmatprep.subr.mxu0 0.0
    %779 = vmatpush1.msra.mxu0 0.0
    %780 = vmatprep.subr.mxu0 0.0
    %781 = vmatpush1.msra.mxu0 0.0
    %782 = vmatprep.subr.mxu0 0.0
    %783 = vmatpush1.msra.mxu0 0.0
    %784 = vmatprep.subr.mxu0 0.0
    %785 = vmatpush1.msra.mxu0 0.0
    %786 = vmatprep.subr.mxu0 0.0
    %787 = vmatpush1.msra.mxu0 0.0
    %788 = vmatprep.subr.mxu0 0.0
    %789 = vmatpush1.msra.mxu0 0.0
    %790 = vmatprep.subr.mxu0 0.0
    %791 = vmatpush1.msra.mxu0 0.0
    %792 = vmatprep.subr.mxu0 0.0
    %793 = vmatpush1.msra.mxu0 0.0
    %794 = vmatprep.subr.mxu0 0.0
    %795 = vmatpush1.msra.mxu0 0.0
    %796 = vmatprep.subr.mxu0 0.0
    %797 = vmatpush1.msra.mxu0 0.0
    %798 = vmatprep.subr.mxu0 0.0
    %799 = vmatpush1.msra.mxu0 0.0
    %800 = vmatprep.mubr.f32.mxu0 0.0
    %801 = vmatmul.mubr.f32.gmra.mrb[0].mxu0 %v571
    %v802 = vpop.f32.mrb[0].mxu0
    %v803 = vadd.f32 0.0, %v802
    %v804 = vpop.f32.mrb[0].mxu0
    %805 = vdwg.mxu0
    %v806 = vld [vmem:[%s8] sm:$0xff]
    %v807 = vmul.f32 %v803, %v806
    %v808 = vld [vmem:[#allocation7] sm:$0xff]
    %v809 = vld [vmem:[#allocation7 + $0x8] sm:$0xff]
    %v810 = vld [vmem:[#allocation7 + $0x10] sm:$0xff]
    %v811 = vld [vmem:[#allocation7 + $0x18] sm:$0xff]
    %v812 = vld [vmem:[#allocation7 + $0x20] sm:$0xff]
    %v813 = vld [vmem:[#allocation7 + $0x28] sm:$0xff]
    %v814 = vld [vmem:[#allocation7 + $0x30] sm:$0xff]
    %v815 = vld [vmem:[#allocation7 + $0x38] sm:$0xff]
    %v816 = vld [vmem:[#allocation7 + $0x40] sm:$0xff]
    %v817 = vld [vmem:[#allocation7 + $0x48] sm:$0xff]
    %v818 = vld [vmem:[#allocation7 + $0x50] sm:$0xff]
    %v819 = vld [vmem:[#allocation7 + $0x58] sm:$0xff]
    %v820 = vld [vmem:[#allocation7 + $0x60] sm:$0xff]
    %v821 = vld [vmem:[#allocation7 + $0x68] sm:$0xff]
    %v822 = vld [vmem:[#allocation7 + $0x70] sm:$0xff]
    %v823 = vld [vmem:[#allocation7 + $0x78] sm:$0xff]
    %824 = vmatprep.subr.mxu0 0.0
    %825 = vmatpush1.msra.mxu0 %v808
    %826 = vmatprep.subr.mxu0 0.0
    %827 = vmatpush1.msra.mxu0 %v809
    %828 = vmatprep.subr.mxu0 0.0
    %829 = vmatpush1.msra.mxu0 %v810
    %830 = vmatprep.subr.mxu0 0.0
    %831 = vmatpush1.msra.mxu0 %v811
    %832 = vmatprep.subr.mxu0 0.0
    %833 = vmatpush1.msra.mxu0 %v812
    %834 = vmatprep.subr.mxu0 0.0
    %835 = vmatpush1.msra.mxu0 %v813
    %836 = vmatprep.subr.mxu0 0.0
    %837 = vmatpush1.msra.mxu0 %v814
    %838 = vmatprep.subr.mxu0 0.0
    %839 = vmatpush1.msra.mxu0 %v815
    %840 = vmatprep.subr.mxu0 0.0
    %841 = vmatpush1.msra.mxu0 %v816
    %842 = vmatprep.subr.mxu0 0.0
    %843 = vmatpush1.msra.mxu0 %v817
    %844 = vmatprep.subr.mxu0 0.0
    %845 = vmatpush1.msra.mxu0 %v818
    %846 = vmatprep.subr.mxu0 0.0
    %847 = vmatpush1.msra.mxu0 %v819
    %848 = vmatprep.subr.mxu0 0.0
    %849 = vmatpush1.msra.mxu0 %v820
    %850 = vmatprep.subr.mxu0 0.0
    %851 = vmatpush1.msra.mxu0 %v821
    %852 = vmatprep.subr.mxu0 0.0
    %853 = vmatpush1.msra.mxu0 %v822
    %854 = vmatprep.subr.mxu0 0.0
    %855 = vmatpush1.msra.mxu0 %v823
    %856 = vmatprep.subr.mxu0 0.0
    %857 = vmatpush1.msra.mxu0 0.0
    %858 = vmatprep.subr.mxu0 0.0
    %859 = vmatpush1.msra.mxu0 0.0
    %860 = vmatprep.subr.mxu0 0.0
    %861 = vmatpush1.msra.mxu0 0.0
    %862 = vmatprep.subr.mxu0 0.0
    %863 = vmatpush1.msra.mxu0 0.0
    %864 = vmatprep.subr.mxu0 0.0
    %865 = vmatpush1.msra.mxu0 0.0
    %866 = vmatprep.subr.mxu0 0.0
    %867 = vmatpush1.msra.mxu0 0.0
    %868 = vmatprep.subr.mxu0 0.0
    %869 = vmatpush1.msra.mxu0 0.0
    %870 = vmatprep.subr.mxu0 0.0
    %871 = vmatpush1.msra.mxu0 0.0
    %872 = vmatprep.subr.mxu0 0.0
    %873 = vmatpush1.msra.mxu0 0.0
    %874 = vmatprep.subr.mxu0 0.0
    %875 = vmatpush1.msra.mxu0 0.0
    %876 = vmatprep.subr.mxu0 0.0
    %877 = vmatpush1.msra.mxu0 0.0
    %878 = vmatprep.subr.mxu0 0.0
    %879 = vmatpush1.msra.mxu0 0.0
    %880 = vmatprep.subr.mxu0 0.0
    %881 = vmatpush1.msra.mxu0 0.0
    %882 = vmatprep.subr.mxu0 0.0
    %883 = vmatpush1.msra.mxu0 0.0
    %884 = vmatprep.subr.mxu0 0.0
    %885 = vmatpush1.msra.mxu0 0.0
    %886 = vmatprep.subr.mxu0 0.0
    %887 = vmatpush1.msra.mxu0 0.0
    %888 = vmatprep.mubr.f32.mxu0 0.0
    %889 = vmatmul.mubr.f32.gmra.mrb[0].mxu0 %v807
    %v890 = vpop.f32.mrb[0].mxu0
    %v891 = vadd.f32 0.0, %v890
    %v892 = vpop.f32.mrb[0].mxu0
    %893 = vdwg.mxu0
    %v894 = vld [vmem:[%s10] sm:$0x3]
    %v895 = vld [vmem:[%s12] sm:$0x1]
    %v897 = vlaneseq
    %v898 = vshrl.u32 %v897, 7
    %v899 = vsub.s32 0, %v898
    %v900 = vrot.slane %v895, %v899
    %v903 = vsel %vm643, %v894, 0
    %905 = vmatprep.subr.mxu0 0.0
    %906 = vmatpush1.msra.mxu0 %v891
    %907 = vmatprep.subr.mxu0 0.0
    %908 = vmatpush1.msra.mxu0 0.0
    %909 = vmatprep.subr.mxu0 0.0
    %910 = vmatpush1.msra.mxu0 0.0
    %911 = vmatprep.subr.mxu0 0.0
    %912 = vmatpush1.msra.mxu0 0.0
    %913 = vmatprep.subr.mxu0 0.0
    %914 = vmatpush1.msra.mxu0 0.0
    %915 = vmatprep.subr.mxu0 0.0
    %916 = vmatpush1.msra.mxu0 0.0
    %917 = vmatprep.subr.mxu0 0.0
    %918 = vmatpush1.msra.mxu0 0.0
    %919 = vmatprep.subr.mxu0 0.0
    %920 = vmatpush1.msra.mxu0 0.0
    %921 = vmatprep.subr.mxu0 0.0
    %922 = vmatpush1.msra.mxu0 0.0
    %923 = vmatprep.subr.mxu0 0.0
    %924 = vmatpush1.msra.mxu0 0.0
    %925 = vmatprep.subr.mxu0 0.0
    %926 = vmatpush1.msra.mxu0 0.0
    %927 = vmatprep.subr.mxu0 0.0
    %928 = vmatpush1.msra.mxu0 0.0
    %929 = vmatprep.subr.mxu0 0.0
    %930 = vmatpush1.msra.mxu0 0.0
    %931 = vmatprep.subr.mxu0 0.0
    %932 = vmatpush1.msra.mxu0 0.0
    %933 = vmatprep.subr.mxu0 0.0
    %934 = vmatpush1.msra.mxu0 0.0
    %935 = vmatprep.subr.mxu0 0.0
    %936 = vmatpush1.msra.mxu0 0.0
    %937 = vmatprep.subr.mxu0 0.0
    %938 = vmatpush1.msra.mxu0 0.0
    %939 = vmatprep.subr.mxu0 0.0
    %940 = vmatpush1.msra.mxu0 0.0
    %941 = vmatprep.subr.mxu0 0.0
    %942 = vmatpush1.msra.mxu0 0.0
    %943 = vmatprep.subr.mxu0 0.0
    %944 = vmatpush1.msra.mxu0 0.0
    %945 = vmatprep.subr.mxu0 0.0
    %946 = vmatpush1.msra.mxu0 0.0
    %947 = vmatprep.subr.mxu0 0.0
    %948 = vmatpush1.msra.mxu0 0.0
    %949 = vmatprep.subr.mxu0 0.0
    %950 = vmatpush1.msra.mxu0 0.0
    %951 = vmatprep.subr.mxu0 0.0
    %952 = vmatpush1.msra.mxu0 0.0
    %953 = vmatprep.subr.mxu0 0.0
    %954 = vmatpush1.msra.mxu0 0.0
    %955 = vmatprep.subr.mxu0 0.0
    %956 = vmatpush1.msra.mxu0 0.0
    %957 = vmatprep.subr.mxu0 0.0
    %958 = vmatpush1.msra.mxu0 0.0
    %959 = vmatprep.subr.mxu0 0.0
    %960 = vmatpush1.msra.mxu0 0.0
    %961 = vmatprep.subr.mxu0 0.0
    %962 = vmatpush1.msra.mxu0 0.0
    %963 = vmatprep.subr.mxu0 0.0
    %964 = vmatpush1.msra.mxu0 0.0
    %965 = vmatprep.subr.mxu0 0.0
    %966 = vmatpush1.msra.mxu0 0.0
    %967 = vmatprep.subr.mxu0 0.0
    %968 = vmatpush1.msra.mxu0 0.0
    %969 = vmatprep.mubr.f32.mxu0 0.0
    %970 = vmatmul.mubr.f32.gmra.mrb[0].mxu0 %v903
    %v971 = vpop.f32.mrb[0].mxu0
    %v972 = vadd.f32 %v900, %v971
    %v973 = vpop.f32.mrb[0].mxu0
    %974 = vdwg.mxu0
    %vm975 = vcmask 254976
    %976 = vst.msk [vmem:[#allocation8] sm:$0x3] %vm975, %v972
    // Predicated region
    $region66: #{forward.1} parent=1 // pred_check
      _
    $region67: #{forward.1} parent=1 // pred_check_branch
      %978 = sbr.rel (0) target = $region69
    $region68: #{forward.1} parent=1 // pred_region
      %s980 = ssub.s32 32, 32
      %981 = vsyncadd [#allocation4], %s980
      %s983 = sshll.u32 [#allocation8], 4
      %s984 = int_to_ptr.vmem [resolvable:$true] %s983
      %986 = dma.vmem_to_hbm [thread:$0]  %s984, 32, %s13, [#allocation4]
    $region69: #{forward.1} parent=1 // pred_fallthru
      _
    // Predicated region
    $region70: #{forward.1} parent=1 // pred_check
      _
    $region71: #{forward.1} parent=1 // pred_check_branch
      %988 = sbr.rel (0) target = $region73
    $region72: #{forward.1} parent=1 // pred_region
      _
    $region73: #{forward.1} parent=1 // pred_fallthru
      _
    // Predicated region
    $region74: #{forward.1} parent=1 // pred_check
      _
    $region75: #{forward.1} parent=1 // pred_check_branch
      %990 = sbr.rel (0) target = $region77
    $region76: #{forward.1} parent=1 // pred_region
      %991 = dma.done [#allocation4], 32
    $region77: #{forward.1} parent=1 // pred_fallthru
      _
    // Predicated region
    $region78: #{forward.1} parent=1 // pred_check
      _
    $region79: #{forward.1} parent=1 // pred_check_branch
      %993 = sbr.rel (0) target = $region81
    $region80: #{forward.1} parent=1 // pred_region
      _
    $region81: #{forward.1} parent=1 // pred_fallthru
      _
    %994 = vsyncpa [#allocation3], 1
    %995 = vsyncpa [#allocation6], 1
    %996 = vsyncpa [#allocation4], 1

</llo_original>
